<compile_context>
chip_gen: v5e
topology: v5e:2x2
jax: 0.10.0
libtpu: 0.0.40
codegen_flags: <defaults>
</compile_context>

<pallas_src>
import jax
import jax.numpy as jnp
from jax.experimental import pallas as pl
from jax.experimental.pallas import tpu as pltpu

_LANE = 128
_SUBLANE_BF16 = 16  # bf16 packs 16 rows per sublane tile


def _round_up(n, m):
    return (n + m - 1) // m * m


# ----------------------------------------------------------------------------
# One-time capability / hardware probes (cached at module level).
# ----------------------------------------------------------------------------
_BUFFERED_SUPPORTED = None
_VMEM_BUDGET = None


def _buffered_weights_supported():
    """Probe once whether pipeline_mode=pl.Buffered(1) lowers & runs on this jax/jaxlib."""
    global _BUFFERED_SUPPORTED
    if _BUFFERED_SUPPORTED is not None:
        return _BUFFERED_SUPPORTED
    try:
        def _copy(a_ref, o_ref):
            o_ref[...] = a_ref[...]

        fn = pl.pallas_call(
            _copy,
            out_shape=jax.ShapeDtypeStruct((16, 128), jnp.float32),
            grid_spec=pltpu.PrefetchScalarGridSpec(
                num_scalar_prefetch=0,
                grid=(2,),
                in_specs=[pl.BlockSpec((8, 128), lambda i: (0, 0),
                                       pipeline_mode=pl.Buffered(1))],
                out_specs=pl.BlockSpec((8, 128), lambda i: (i, 0)),
            ),
        )
        jax.block_until_ready(fn(jnp.ones((8, 128), jnp.float32)))
        _BUFFERED_SUPPORTED = True
    except Exception:
        _BUFFERED_SUPPORTED = False
    return _BUFFERED_SUPPORTED


def _vmem_budget_bytes():
    """~80% of the per-core VMEM capacity (queried from hardware, fallback 64 MiB)."""
    global _VMEM_BUDGET
    if _VMEM_BUDGET is None:
        try:
            cap = int(pltpu.get_tpu_info().vmem_capacity_bytes)
        except Exception:
            cap = 64 * 1024 * 1024
        _VMEM_BUDGET = max(int(cap * 0.8), 16 * 1024 * 1024)
    return _VMEM_BUDGET


# ----------------------------------------------------------------------------
# Kernel: one batch tile through three back-to-back MXU matmuls, ReLU on the VPU.
# Weights/biases are grid-invariant (resident in VMEM across all batch tiles).
# ----------------------------------------------------------------------------
def mlp_kernel(x_ref, w1_ref, b1_ref, w2_ref, b2_ref, w3_ref, b3_ref, o_ref):
    x = x_ref[...]                                                            # (tb, in_p) bf16
    h1 = jnp.dot(x, w1_ref[...], preferred_element_type=jnp.float32) + b1_ref[...]
    h1 = jnp.maximum(h1, 0.0).astype(jnp.bfloat16)                            # (tb, h1_p)
    h2 = jnp.dot(h1, w2_ref[...], preferred_element_type=jnp.float32) + b2_ref[...]
    h2 = jnp.maximum(h2, 0.0).astype(jnp.bfloat16)                            # (tb, h2_p)
    out = jnp.dot(h2, w3_ref[...], preferred_element_type=jnp.float32) + b3_ref[...]
    o_ref[...] = out.astype(o_ref.dtype)                                      # (tb, out_p) bf16


# ----------------------------------------------------------------------------
# One-time parameter prep: transpose to (in, out), zero-pad to lane multiples, bf16.
# Zero padding is exact: padded K rows contribute 0, padded hidden columns stay 0
# through bias (padded with 0) + ReLU, padded output columns are sliced off.
# ----------------------------------------------------------------------------
def prepare_params(params):
    def pad2(a, rows, cols, dtype):
        buf = jnp.zeros((rows, cols), dtype)
        return buf.at[: a.shape[0], : a.shape[1]].set(a.astype(dtype))

    in_size = params["w1"].shape[1]
    h1_size = params["w1"].shape[0]
    h2_size = params["w2"].shape[0]
    out_size = params["w3"].shape[0]

    in_p = _round_up(in_size, _LANE)
    h1_p = _round_up(h1_size, _LANE)
    h2_p = _round_up(h2_size, _LANE)
    out_p = _round_up(out_size, _LANE)

    w1 = pad2(params["w1"].T, in_p, h1_p, jnp.bfloat16)
    w2 = pad2(params["w2"].T, h1_p, h2_p, jnp.bfloat16)
    w3 = pad2(params["w3"].T, h2_p, out_p, jnp.bfloat16)
    b1 = pad2(params["b1"][None, :], 1, h1_p, jnp.float32)
    b2 = pad2(params["b2"][None, :], 1, h2_p, jnp.float32)
    b3 = pad2(params["b3"][None, :], 1, out_p, jnp.float32)
    return (w1, b1, w2, b2, w3, b3)


def _choose_tile_b(B, requested):
    """16-aligned batch tile; prefer >=2 tiles (v7x dual TensorCore) for moderate B."""
    if requested is not None:
        return _round_up(max(requested, _SUBLANE_BF16), _SUBLANE_BF16)
    if B <= _SUBLANE_BF16:
        return _SUBLANE_BF16
    if B <= 256:
        # Split into (at least) two tiles so dimension_semantics=("parallel",) can
        # shard across both v7x TensorCores instead of padding into one giant tile.
        return max(_SUBLANE_BF16, min(_round_up(pl.cdiv(B, 2), _SUBLANE_BF16), 256))
    return 256


# ----------------------------------------------------------------------------
# Forward factory: prep params once, return a jitted forward(x).
# ----------------------------------------------------------------------------
def make_mlp_forward(params, *, tile_b=None):
    prep = prepare_params(params)
    out_size = int(params["w3"].shape[0])
    use_buffered = _buffered_weights_supported()   # one-time cached probe
    vmem_budget = _vmem_budget_bytes()             # one-time cached HW query

    def _forward(x, w1, b1, w2, b2, w3, b3):
        B, in_size = x.shape
        in_p, h1_p = w1.shape
        h2_p = w2.shape[1]
        out_p = w3.shape[1]

        tb = _choose_tile_b(B, tile_b)
        B_pad = _round_up(B, tb)
        grid_b = B_pad // tb

        xp = jnp.zeros((B_pad, in_p), jnp.bfloat16)
        xp = xp.at[:B, :in_size].set(x.astype(jnp.bfloat16))

        # VMEM estimate: resident weights (1 or 2 buffers), double-buffered bf16
        # x/out tiles, f32+bf16 intermediate activations; 1.5x headroom, derated cap.
        nbuf_w = 1 if use_buffered else 2
        weight_bytes = nbuf_w * 2 * (in_p * h1_p + h1_p * h2_p + h2_p * out_p)
        bias_bytes = nbuf_w * 4 * (h1_p + h2_p + out_p)
        io_bytes = 2 * tb * in_p * 2 + 2 * tb * out_p * 2
        act_bytes = tb * (h1_p + h2_p) * (4 + 2)
        est = weight_bytes + bias_bytes + io_bytes + act_bytes
        vmem_limit = int(min(max(int(est * 1.5), 16 * 1024 * 1024), vmem_budget))

        if use_buffered:
            # Grid-invariant operands: fetched once, resident, no 2x double-buffering.
            def resident(shape):
                return pl.BlockSpec(shape, lambda i: (0, 0), pipeline_mode=pl.Buffered(1))
        else:
            def resident(shape):
                return pl.BlockSpec(shape, lambda i: (0, 0))

        out_padded = pl.pallas_call(
            mlp_kernel,
            out_shape=jax.ShapeDtypeStruct((B_pad, out_p), jnp.bfloat16),
            grid_spec=pltpu.PrefetchScalarGridSpec(
                num_scalar_prefetch=0,
                grid=(grid_b,),
                in_specs=[
                    pl.BlockSpec((tb, in_p), lambda i: (i, 0)),   # x batch tile (pipelined)
                    resident((in_p, h1_p)),                       # W1
                    resident((1, h1_p)),                          # b1
                    resident((h1_p, h2_p)),                       # W2
                    resident((1, h2_p)),                          # b2
                    resident((h2_p, out_p)),                      # W3
                    resident((1, out_p)),                         # b3
                ],
                out_specs=pl.BlockSpec((tb, out_p), lambda i: (i, 0)),
            ),
            compiler_params=pltpu.CompilerParams(
                dimension_semantics=("parallel",),
                vmem_limit_bytes=vmem_limit,
            ),
        )(xp, w1, b1, w2, b2, w3, b3)

        return out_padded[:B, :out_size].astype(x.dtype)

    jitted = jax.jit(_forward)

    def forward(x):
        return jitted(x, *prep)

    return forward


# ----------------------------------------------------------------------------
# Parameter init (mimics nn.Linear default: U(-1/sqrt(fan_in), 1/sqrt(fan_in)))
# and a pure-JAX reference for correctness checking.
# ----------------------------------------------------------------------------
def init_params(key, input_size, hidden1, hidden2, output_size):
    keys = jax.random.split(key, 6)

    def linear(kw, kb, fan_in, fan_out):
        bound = 1.0 / jnp.sqrt(fan_in)
        w = jax.random.uniform(kw, (fan_out, fan_in), jnp.float32, -bound, bound)
        b = jax.random.uniform(kb, (fan_out,), jnp.float32, -bound, bound)
        return w, b

    w1, b1 = linear(keys[0], keys[1], input_size, hidden1)
    w2, b2 = linear(keys[2], keys[3], hidden1, hidden2)
    w3, b3 = linear(keys[4], keys[5], hidden2, output_size)
    return {"w1": w1, "b1": b1, "w2": w2, "b2": b2, "w3": w3, "b3": b3}


def mlp_reference(x, p):
    h1 = jnp.maximum(x @ p["w1"].T + p["b1"], 0.0)
    h2 = jnp.maximum(h1 @ p["w2"].T + p["b2"], 0.0)
    return h2 @ p["w3"].T + p["b3"]


if __name__ == "__main__":
    key = jax.random.PRNGKey(0)
    batch = 8
    input_size, hidden1, hidden2, output_size = 32, 64, 32, 16

    k_x, k_p = jax.random.split(key)
    x = jax.random.normal(k_x, (batch, input_size), jnp.float32)
    params = init_params(k_p, input_size, hidden1, hidden2, output_size)

    forward = make_mlp_forward(params)   # one-time prep + jitted forward
    out = jax.block_until_ready(forward(x))

    ref = mlp_reference(x, params)
    assert out.shape == (batch, output_size)
    assert out.dtype == x.dtype
    # bf16 MXU inputs / bf16 activations & output with f32 accumulation:
    # tolerance loosened vs the pure-f32 reference.
    assert jnp.allclose(out, ref, atol=5e-2, rtol=5e-2), "mismatch vs reference"

    print("KERNEL_OK")
</pallas_src>

<mosaic_0001>
module attributes {stable_mosaic.version = 11 : i64} {
  func.func @_copy(%arg0: i32, %arg1: memref<8x128xf32, #tpu.memory_space<vmem>>, %arg2: memref<8x128xf32, #tpu.memory_space<vmem>>) attributes {dimension_semantics = [#tpu.dimension_semantics<arbitrary>], iteration_bounds = array<i64: 2>, scalar_prefetch = 0 : i64, scratch_operands = 0 : i64, tpu.core_type = #tpu.core_type<tc>, window_params = [{pipeline_mode = #tpu.pipeline_mode<synchronous>, transform_indices = @transform_0, window_bounds = array<i64: 8, 128>}, {transform_indices = @transform_1, window_bounds = array<i64: 8, 128>}]} {
    %c0 = arith.constant 0 : index
    %c0_0 = arith.constant 0 : index
    %0 = vector.load %arg1[%c0, %c0_0] : memref<8x128xf32, #tpu.memory_space<vmem>>, vector<8x128xf32>
    %c0_1 = arith.constant 0 : index
    %c0_2 = arith.constant 0 : index
    %1 = vector.load %arg2[%c0_1, %c0_2] : memref<8x128xf32, #tpu.memory_space<vmem>>, vector<8x128xf32>
    tpu.vector_store %arg2[%c0_1, %c0_2], %0 {strides = array<i32>} : memref<8x128xf32, #tpu.memory_space<vmem>>, vector<8x128xf32>,
    return
  }
  func.func @transform_0(%arg0: i32) -> (i32, i32) {
    %c0_i32 = arith.constant 0 : i32
    %c0_i32_0 = arith.constant 0 : i32
    %c0_i32_1 = arith.constant 0 : i32
    return %c0_i32, %c0_i32_0 : i32, i32
  }
  func.func @transform_1(%arg0: i32) -> (i32, i32) {
    %c0_i32 = arith.constant 0 : i32
    %c0_i32_0 = arith.constant 0 : i32
    return %arg0, %c0_i32 : i32, i32
  }
}

module attributes {stable_mosaic.version = 11 : i64} {
  func.func @mlp_kernel(%arg0: i32, %arg1: memref<16x128xbf16, #tpu.memory_space<vmem>>, %arg2: memref<128x128xbf16, #tpu.memory_space<vmem>>, %arg3: memref<1x128xf32, #tpu.memory_space<vmem>>, %arg4: memref<128x128xbf16, #tpu.memory_space<vmem>>, %arg5: memref<1x128xf32, #tpu.memory_space<vmem>>, %arg6: memref<128x128xbf16, #tpu.memory_space<vmem>>, %arg7: memref<1x128xf32, #tpu.memory_space<vmem>>, %arg8: memref<16x128xbf16, #tpu.memory_space<vmem>>) attributes {dimension_semantics = [#tpu.dimension_semantics<parallel>], iteration_bounds = array<i64: 1>, scalar_prefetch = 0 : i64, scratch_operands = 0 : i64, tpu.core_type = #tpu.core_type<tc>, window_params = [{transform_indices = @transform_0, window_bounds = array<i64: 16, 128>}, {pipeline_mode = #tpu.pipeline_mode<synchronous>, transform_indices = @transform_1, window_bounds = array<i64: 128, 128>}, {pipeline_mode = #tpu.pipeline_mode<synchronous>, transform_indices = @transform_2, window_bounds = array<i64: 1, 128>}, {pipeline_mode = #tpu.pipeline_mode<synchronous>, transform_indices = @transform_3, window_bounds = array<i64: 128, 128>}, {pipeline_mode = #tpu.pipeline_mode<synchronous>, transform_indices = @transform_4, window_bounds = array<i64: 1, 128>}, {pipeline_mode = #tpu.pipeline_mode<synchronous>, transform_indices = @transform_5, window_bounds = array<i64: 128, 128>}, {pipeline_mode = #tpu.pipeline_mode<synchronous>, transform_indices = @transform_6, window_bounds = array<i64: 1, 128>}, {transform_indices = @transform_7, window_bounds = array<i64: 16, 128>}]} {
    %c0 = arith.constant 0 : index
    %c0_0 = arith.constant 0 : index
    %0 = vector.load %arg1[%c0, %c0_0] : memref<16x128xbf16, #tpu.memory_space<vmem>>, vector<16x128xbf16>
    %c0_1 = arith.constant 0 : index
    %c0_2 = arith.constant 0 : index
    %1 = vector.load %arg2[%c0_1, %c0_2] : memref<128x128xbf16, #tpu.memory_space<vmem>>, vector<128x128xbf16>
    %cst = arith.constant dense<0.000000e+00> : vector<16x128xf32>
    %2 = tpu.matmul %0, %1, %cst {dimension_numbers = #tpu.dot_dimension_numbers<[1], [0], [0], [1], [0, 0, 1, 1], [], []>} : vector<16x128xbf16>, vector<128x128xbf16>, vector<16x128xf32> -> vector<16x128xf32>
    %c0_3 = arith.constant 0 : index
    %c0_4 = arith.constant 0 : index
    %3 = vector.load %arg3[%c0_3, %c0_4] : memref<1x128xf32, #tpu.memory_space<vmem>>, vector<1x128xf32>
    %4 = vector.broadcast %3 : vector<1x128xf32> to vector<16x128xf32>
    %5 = arith.addf %2, %4 : vector<16x128xf32>
    %cst_5 = arith.constant 0.000000e+00 : f32
    %6 = vector.broadcast %cst_5 : f32 to vector<16x128xf32>
    %7 = arith.maximumf %5, %6 : vector<16x128xf32>
    %8 = arith.truncf %7 : vector<16x128xf32> to vector<16x128xbf16>
    %c0_6 = arith.constant 0 : index
    %c0_7 = arith.constant 0 : index
    %9 = vector.load %arg4[%c0_6, %c0_7] : memref<128x128xbf16, #tpu.memory_space<vmem>>, vector<128x128xbf16>
    %cst_8 = arith.constant dense<0.000000e+00> : vector<16x128xf32>
    %10 = tpu.matmul %8, %9, %cst_8 {dimension_numbers = #tpu.dot_dimension_numbers<[1], [0], [0], [1], [0, 0, 1, 1], [], []>} : vector<16x128xbf16>, vector<128x128xbf16>, vector<16x128xf32> -> vector<16x128xf32>
    %c0_9 = arith.constant 0 : index
    %c0_10 = arith.constant 0 : index
    %11 = vector.load %arg5[%c0_9, %c0_10] : memref<1x128xf32, #tpu.memory_space<vmem>>, vector<1x128xf32>
    %12 = vector.broadcast %11 : vector<1x128xf32> to vector<16x128xf32>
    %13 = arith.addf %10, %12 : vector<16x128xf32>
    %cst_11 = arith.constant 0.000000e+00 : f32
    %14 = vector.broadcast %cst_11 : f32 to vector<16x128xf32>
    %15 = arith.maximumf %13, %14 : vector<16x128xf32>
    %16 = arith.truncf %15 : vector<16x128xf32> to vector<16x128xbf16>
    %c0_12 = arith.constant 0 : index
    %c0_13 = arith.constant 0 : index
    %17 = vector.load %arg6[%c0_12, %c0_13] : memref<128x128xbf16, #tpu.memory_space<vmem>>, vector<128x128xbf16>
    %cst_14 = arith.constant dense<0.000000e+00> : vector<16x128xf32>
    %18 = tpu.matmul %16, %17, %cst_14 {dimension_numbers = #tpu.dot_dimension_numbers<[1], [0], [0], [1], [0, 0, 1, 1], [], []>} : vector<16x128xbf16>, vector<128x128xbf16>, vector<16x128xf32> -> vector<16x128xf32>
    %c0_15 = arith.constant 0 : index
    %c0_16 = arith.constant 0 : index
    %19 = vector.load %arg7[%c0_15, %c0_16] : memref<1x128xf32, #tpu.memory_space<vmem>>, vector<1x128xf32>
    %20 = vector.broadcast %19 : vector<1x128xf32> to vector<16x128xf32>
    %21 = arith.addf %18, %20 : vector<16x128xf32>
    %22 = arith.truncf %21 : vector<16x128xf32> to vector<16x128xbf16>
    %c0_17 = arith.constant 0 : index
    %c0_18 = arith.constant 0 : index
    %23 = vector.load %arg8[%c0_17, %c0_18] : memref<16x128xbf16, #tpu.memory_space<vmem>>, vector<16x128xbf16>
    tpu.vector_store %arg8[%c0_17, %c0_18], %22 {strides = array<i32>} : memref<16x128xbf16, #tpu.memory_space<vmem>>, vector<16x128xbf16>,
    return
  }
  func.func @transform_0(%arg0: i32) -> (i32, i32) {
    %c0_i32 = arith.constant 0 : i32
    %c0_i32_0 = arith.constant 0 : i32
    return %arg0, %c0_i32 : i32, i32
  }
  func.func @transform_1(%arg0: i32) -> (i32, i32) {
    %c0_i32 = arith.constant 0 : i32
    %c0_i32_0 = arith.constant 0 : i32
    %c0_i32_1 = arith.constant 0 : i32
    return %c0_i32, %c0_i32_0 : i32, i32
  }
  func.func @transform_2(%arg0: i32) -> (i32, i32) {
    %c0_i32 = arith.constant 0 : i32
    %c0_i32_0 = arith.constant 0 : i32
    %c0_i32_1 = arith.constant 0 : i32
    return %c0_i32, %c0_i32_0 : i32, i32
  }
  func.func @transform_3(%arg0: i32) -> (i32, i32) {
    %c0_i32 = arith.constant 0 : i32
    %c0_i32_0 = arith.constant 0 : i32
    %c0_i32_1 = arith.constant 0 : i32
    return %c0_i32, %c0_i32_0 : i32, i32
  }
  func.func @transform_4(%arg0: i32) -> (i32, i32) {
    %c0_i32 = arith.constant 0 : i32
    %c0_i32_0 = arith.constant 0 : i32
    %c0_i32_1 = arith.constant 0 : i32
    return %c0_i32, %c0_i32_0 : i32, i32
  }
  func.func @transform_5(%arg0: i32) -> (i32, i32) {
    %c0_i32 = arith.constant 0 : i32
    %c0_i32_0 = arith.constant 0 : i32
    %c0_i32_1 = arith.constant 0 : i32
    return %c0_i32, %c0_i32_0 : i32, i32
  }
  func.func @transform_6(%arg0: i32) -> (i32, i32) {
    %c0_i32 = arith.constant 0 : i32
    %c0_i32_0 = arith.constant 0 : i32
    %c0_i32_1 = arith.constant 0 : i32
    return %c0_i32, %c0_i32_0 : i32, i32
  }
  func.func @transform_7(%arg0: i32) -> (i32, i32) {
    %c0_i32 = arith.constant 0 : i32
    %c0_i32_0 = arith.constant 0 : i32
    return %arg0, %c0_i32 : i32, i32
  }
}

</mosaic_0001>

<llo_original>
// kernel: tpu_custom_call.1
$region0: #{tpu_custom_call.1}
  #allocation0 [shape = 'u32[]', space=smem, size = 0x4, offset = 0x4, fixed_abs, tag = 'smem constant byte address 0x4 - core index']
  #allocation1 [shape = 'u32[72,128]{1,0:T(1,128)}', space=vmem, size = 0x9000, scoped, tag = 'internal scratch']
  %s0 = inlined_call_operand.hbm [shape: f32[8,128], index: 0, kind: input, shape index: {}]
  %s1 = inlined_call_operand.hbm [shape: f32[16,128], index: 1, kind: output, shape index: {}]
  %s2 = sld [smem:[#allocation0]]
  $region41: #{tpu_custom_call.1} parent=0
    _
  %s4 = ssub.s32 1, %s2
  %s5 = scalar_select 0, %s4, %s2
  $region1: #{tpu_custom_call.1} parent=0
    #allocation2 [shape = 'u8[4096]{0}', space=vmem, size = 0x1000, scoped, tag = 'input window, operand 0, single buffered']
    #allocation3 [shape = 's32[2]{0}', space=sflag, size = 0x8, scoped, tag = 'scoped memory for tpu_custom_call.1']
    #allocation4 [shape = 's32[2]{0}', space=sflag, size = 0x8, scoped, tag = 'scoped memory for tpu_custom_call.1']
    #allocation5 [shape = 'u8[8192]{0}', space=vmem, size = 0x2000, scoped, tag = 'output window, operand 0']
    %6 = vsyncpa [#allocation3], 0
    %7 = vsyncpa [#allocation4], 0
    %s8 = scalar_lea.sflag [#allocation4], 1
    %9 = vsyncpa %s8, 0
    loop: start=0, step=1, limit=4
    $region2: #{tpu_custom_call.1} parent=1 // loop_pre_header
      _
    $region3: #{tpu_custom_call.1} parent=1 // loop_header
      %s11 = sphi 0, %s15
      %p12 = scmp.ge.s32.totalorder %s11, 4
      %s19 = sphi 0, %s19
      %s21 = sphi 0, %s19
      %s22 = sphi 0, %s21
      %s36 = sphi 0, %s22
      %s42 = sphi 0, %s44
      %s45 = sphi 0, %s42
      %s46 = sphi 0, %s45
      %s62 = sphi 0, %s46
    $region4: #{tpu_custom_call.1} parent=1 // loop_header_branch
      %14 = sbr.rel (%p12) target = $region8
    $region5: #{tpu_custom_call.1} parent=1 // loop_body
      %s16 = ssub.s32 %s11, 1
      %s17 = ssub.s32 %s11, 2
      %s18 = sadd.s32 %s11, 1
      %s20 = sadd.s32 %s19, 1
      %p23 = scmp.eq.s32.totalorder %s11, 1
      %p24 = scmp.ne.s32.totalorder %s19, %s21
      %p25 = scmp.eq.s32.totalorder %s11, 0
      %p26 = por %p24, %p25
      %p27 = scmp.ne.s32.totalorder %s19, %s21
      %p28 = scmp.eq.s32.totalorder %s16, 1
      %p29 = por %p27, %p28
      %p30 = scmp.ne.s32.totalorder %s21, %s22
      %p31 = scmp.eq.s32.totalorder %s16, 0
      %p32 = por %p30, %p31
      %p33 = scmp.ne.s32.totalorder %s21, %s22
      %p34 = scmp.eq.s32.totalorder %s17, 1
      %p35 = por %p33, %p34
      %p37 = scmp.ne.s32.totalorder %s22, %s36
      %p38 = scmp.eq.s32.totalorder %s17, 0
      %p39 = por %p37, %p38
      %s40 = ssub.s32 %s11, %s18
      %p41 = scmp.eq.s32.totalorder %s40, 0
      %s43 = sadd.s32 %s42, 1
      %s44 = scalar_select %p41, %s42, %s43
      %p47 = pneg %p41
      %p48 = scmp.eq.s32.totalorder %s11, 1
      %p49 = por %p47, %p48
      %p50 = scmp.ne.s32.totalorder %s42, %s45
      %p51 = scmp.eq.s32.totalorder %s11, 0
      %p52 = por %p50, %p51
      %p53 = scmp.ne.s32.totalorder %s42, %s45
      %p54 = scmp.eq.s32.totalorder %s16, 1
      %p55 = por %p53, %p54
      %p56 = scmp.ne.s32.totalorder %s45, %s46
      %p57 = scmp.eq.s32.totalorder %s16, 0
      %p58 = por %p56, %p57
      %p59 = scmp.ne.s32.totalorder %s45, %s46
      %p60 = scmp.eq.s32.totalorder %s17, 1
      %p61 = por %p59, %p60
      %p63 = scmp.ne.s32.totalorder %s46, %s62
      %p64 = scmp.eq.s32.totalorder %s17, 0
      %p65 = por %p63, %p64
      %p66 = scmp.le.s32.totalorder 1, %s11
      %p67 = scmp.lt.s32.totalorder %s11, 3
      %p68 = pnand %p66, %p67
      %p69 = pneg %p68
      // Predicated region
      $region9: #{tpu_custom_call.1} parent=5 // pred_check
        _
      $region10: #{tpu_custom_call.1} parent=5 // pred_check_branch
        %71 = sbr.rel (%p68) target = $region12
      $region11: #{tpu_custom_call.1} parent=5 // pred_region
        %s72 = ssub.s32 %s11, 1
        // Predicated region
        $region13: #{tpu_custom_call.1} parent=11 // pred_check
          %p73 = pneg %p32
        $region14: #{tpu_custom_call.1} parent=11 // pred_check_branch
          %75 = sbr.rel (%p73) target = $region16
        $region15: #{tpu_custom_call.1} parent=11 // pred_region
          %77 = vsyncadd [#allocation3], 0
          %s79 = sshll.u32 %s0, 4
          %s80 = int_to_ptr.hbm [resolvable:$true] %s79
          %s81 = sshll.u32 [#allocation2], 4
          %s82 = int_to_ptr.vmem [resolvable:$true] %s81
          %84 = dma.hbm_to_vmem [thread:$0]  %s80, 128, %s82, [#allocation3]
        $region16: #{tpu_custom_call.1} parent=11 // pred_fallthru
          _
      $region12: #{tpu_custom_call.1} parent=5 // pred_fallthru
        _
      %p85 = scmp.lt.s32.totalorder %s11, 2
      // Predicated region
      $region17: #{tpu_custom_call.1} parent=5 // pred_check
        %p86 = pneg %p85
      $region18: #{tpu_custom_call.1} parent=5 // pred_check_branch
        %88 = sbr.rel (%p86) target = $region20
      $region19: #{tpu_custom_call.1} parent=5 // pred_region
        _
      $region20: #{tpu_custom_call.1} parent=5 // pred_fallthru
        _
      %p89 = scmp.le.s32.totalorder 1, %s11
      %p90 = scmp.lt.s32.totalorder %s11, 3
      %p91 = pnand %p89, %p90
      %p92 = pneg %p91
      // Predicated region
      $region21: #{tpu_custom_call.1} parent=5 // pred_check
        _
      $region22: #{tpu_custom_call.1} parent=5 // pred_check_branch
        %94 = sbr.rel (%p91) target = $region24
      $region23: #{tpu_custom_call.1} parent=5 // pred_region
        %s95 = ssub.s32 %s11, 1
        // Predicated region
        $region25: #{tpu_custom_call.1} parent=23 // pred_check
          %p96 = pneg %p32
        $region26: #{tpu_custom_call.1} parent=23 // pred_check_branch
          %98 = sbr.rel (%p96) target = $region28
        $region27: #{tpu_custom_call.1} parent=23 // pred_region
          %100 = dma.done [#allocation3], 128
        $region28: #{tpu_custom_call.1} parent=23 // pred_fallthru
          _
        %p101 = pneg %p32
        %p102 = pneg %p29
        %p103 = pneg %p58
        %p104 = pneg %p55
        %s105 = sand.u32 %s45, 1
        %s106 = scalar_lea.sflag [#allocation4], %s105
        %s107 = sand.u32 %s45, 1
        %s108 = smul.addr %s107, 8
        %s109 = scalar_lea.vmem [#allocation5], %s108
        %v110 = vld [vmem:[#allocation2] sm:$0xff]
        %111 = vst [vmem:[%s109] sm:$0xff] %v110
        %s112 = sand.u32 %s45, 1
        %s113 = scalar_lea.sflag [#allocation4], %s112
        %s114 = sand.u32 %s45, 1
        %s115 = smul.addr %s114, 8
        %s116 = scalar_lea.vmem [#allocation5], %s115
        // Predicated region
        $region29: #{tpu_custom_call.1} parent=23 // pred_check
          %p117 = pneg %p55
        $region30: #{tpu_custom_call.1} parent=23 // pred_check_branch
          %119 = sbr.rel (%p117) target = $region32
        $region31: #{tpu_custom_call.1} parent=23 // pred_region
          %121 = vsyncadd %s113, 0
          %s122 = smul.addr %s16, 8
          %s123 = scalar_lea.hbm %s1, %s122
          %s125 = sshll.u32 %s116, 4
          %s126 = int_to_ptr.vmem [resolvable:$true] %s125
          %s127 = sshll.u32 %s123, 4
          %s128 = int_to_ptr.hbm [resolvable:$true] %s127
          %130 = dma.vmem_to_hbm [thread:$0]  %s126, 128, %s128, %s113
        $region32: #{tpu_custom_call.1} parent=23 // pred_fallthru
          _
      $region24: #{tpu_custom_call.1} parent=5 // pred_fallthru
        _
      %p131 = scmp.le.s32.totalorder 2, %s11
      // Predicated region
      $region33: #{tpu_custom_call.1} parent=5 // pred_check
        %p132 = pneg %p131
      $region34: #{tpu_custom_call.1} parent=5 // pred_check_branch
        %134 = sbr.rel (%p132) target = $region36
      $region35: #{tpu_custom_call.1} parent=5 // pred_region
        %s135 = ssub.s32 %s11, 2
        // Predicated region
        $region37: #{tpu_custom_call.1} parent=35 // pred_check
          %p136 = pneg %p61
        $region38: #{tpu_custom_call.1} parent=35 // pred_check_branch
          %138 = sbr.rel (%p136) target = $region40
        $region39: #{tpu_custom_call.1} parent=35 // pred_region
          %s139 = sand.u32 %s46, 1
          %s140 = scalar_lea.sflag [#allocation4], %s139
          %s141 = sand.u32 %s46, 1
          %s142 = smul.addr %s141, 8
          %s143 = scalar_lea.vmem [#allocation5], %s142
          %145 = dma.done %s140, 128
        $region40: #{tpu_custom_call.1} parent=35 // pred_fallthru
          _
      $region36: #{tpu_custom_call.1} parent=5 // pred_fallthru
        _
    $region6: #{tpu_custom_call.1} parent=1 // loop_footer
      %s15 = sadd.s32 1, %s11
    $region7: #{tpu_custom_call.1} parent=1 // loop_footer_branch
      %10 = sbr.rel target = $region3
    $region8: #{tpu_custom_call.1} parent=1 // loop_exit
      _
    %146 = vsyncpa [#allocation3], 1
    %s147 = scalar_lea.sflag [#allocation3], 1
    %148 = vsyncpa %s147, 1
    %149 = vsyncpa [#allocation4], 1
    %s150 = scalar_lea.sflag [#allocation4], 1
    %151 = vsyncpa %s150, 1

// kernel: _forward.1
$region0: #{_forward.1}
  #allocation0 [shape = 'u32[]', space=smem, size = 0x4, offset = 0x4, fixed_abs, tag = 'smem constant byte address 0x4 - core index']
  #allocation1 [shape = 'u32[72,128]{1,0:T(1,128)}', space=vmem, size = 0x9000, scoped, tag = 'internal scratch']
  %s0 = inlined_call_operand.vmem [shape: bf16[16,128], index: 0, kind: input, shape index: {}]
  %s1 = inlined_call_operand.hbm [shape: bf16[128,128], index: 1, kind: input, shape index: {}]
  %s2 = inlined_call_operand.vmem [shape: f32[1,128], index: 2, kind: input, shape index: {}]
  %s3 = inlined_call_operand.hbm [shape: bf16[128,128], index: 3, kind: input, shape index: {}]
  %s4 = inlined_call_operand.vmem [shape: f32[1,128], index: 4, kind: input, shape index: {}]
  %s5 = inlined_call_operand.hbm [shape: bf16[128,128], index: 5, kind: input, shape index: {}]
  %s6 = inlined_call_operand.vmem [shape: f32[1,128], index: 6, kind: input, shape index: {}]
  %s7 = inlined_call_operand.vmem [shape: bf16[16,128], index: 7, kind: output, shape index: {}]
  %s8 = sld [smem:[#allocation0]]
  $region50: #{_forward.1} parent=0
    _
  %s10 = ssub.s32 1, %s8
  %s11 = scalar_select 0, %s10, %s8
  $region1: #{_forward.1} parent=0
    #allocation2 [shape = 'u8[32768]{0}', space=vmem, size = 0x8000, scoped, tag = 'input window, operand 1, single buffered']
    #allocation3 [shape = 's32[1]{0}', space=sflag, size = 0x4, scoped, tag = 'scoped memory for _forward.1']
    #allocation4 [shape = 'u8[32768]{0}', space=vmem, size = 0x8000, scoped, tag = 'input window, operand 3, single buffered']
    #allocation5 [shape = 's32[1]{0}', space=sflag, size = 0x4, scoped, tag = 'scoped memory for _forward.1']
    #allocation6 [shape = 'u8[32768]{0}', space=vmem, size = 0x8000, scoped, tag = 'input window, operand 5, single buffered']
    %12 = vsyncpa [#allocation3], 0
    %13 = vsyncpa [#allocation5], 0
    // Predicated region
    $region2: #{_forward.1} parent=1 // pred_check
      _
    $region3: #{_forward.1} parent=1 // pred_check_branch
      %15 = sbr.rel (0) target = $region5
    $region4: #{_forward.1} parent=1 // pred_region
      _
    $region5: #{_forward.1} parent=1 // pred_fallthru
      _
    // Predicated region
    $region6: #{_forward.1} parent=1 // pred_check
      _
    $region7: #{_forward.1} parent=1 // pred_check_branch
      %17 = sbr.rel (0) target = $region9
    $region8: #{_forward.1} parent=1 // pred_region
      %19 = vsyncadd [#allocation3], 0
      %s20 = sshll.u32 %s1, 4
      %s21 = int_to_ptr.hbm [resolvable:$true] %s20
      %s22 = sshll.u32 [#allocation2], 4
      %s23 = int_to_ptr.vmem [resolvable:$true] %s22
      %28 = dma.hbm_to_vmem [thread:$0]  %s21, 1024, %s23, [#allocation3], 64, 64, 4
    $region9: #{_forward.1} parent=1 // pred_fallthru
      _
    // Predicated region
    $region10: #{_forward.1} parent=1 // pred_check
      _
    $region11: #{_forward.1} parent=1 // pred_check_branch
      %30 = sbr.rel (0) target = $region13
    $region12: #{_forward.1} parent=1 // pred_region
      _
    $region13: #{_forward.1} parent=1 // pred_fallthru
      _
    // Predicated region
    $region14: #{_forward.1} parent=1 // pred_check
      _
    $region15: #{_forward.1} parent=1 // pred_check_branch
      %32 = sbr.rel (0) target = $region17
    $region16: #{_forward.1} parent=1 // pred_region
      %34 = vsyncadd [#allocation5], 0
      %s35 = sshll.u32 %s3, 4
      %s36 = int_to_ptr.hbm [resolvable:$true] %s35
      %s37 = sshll.u32 [#allocation4], 4
      %s38 = int_to_ptr.vmem [resolvable:$true] %s37
      %43 = dma.hbm_to_vmem [thread:$0]  %s36, 1024, %s38, [#allocation5], 64, 64, 4
    $region17: #{_forward.1} parent=1 // pred_fallthru
      _
    // Predicated region
    $region18: #{_forward.1} parent=1 // pred_check
      _
    $region19: #{_forward.1} parent=1 // pred_check_branch
      %45 = sbr.rel (0) target = $region21
    $region20: #{_forward.1} parent=1 // pred_region
      _
    $region21: #{_forward.1} parent=1 // pred_fallthru
      _
    // Predicated region
    $region22: #{_forward.1} parent=1 // pred_check
      _
    $region23: #{_forward.1} parent=1 // pred_check_branch
      %47 = sbr.rel (0) target = $region25
    $region24: #{_forward.1} parent=1 // pred_region
      %49 = vsyncadd [#allocation5], 0
      %s50 = sshll.u32 %s5, 4
      %s51 = int_to_ptr.hbm [resolvable:$true] %s50
      %s52 = sshll.u32 [#allocation6], 4
      %s53 = int_to_ptr.vmem [resolvable:$true] %s52
      %58 = dma.hbm_to_vmem [thread:$0]  %s51, 1024, %s53, [#allocation5], 64, 64, 4
    $region25: #{_forward.1} parent=1 // pred_fallthru
      _
    // Predicated region
    $region26: #{_forward.1} parent=1 // pred_check
      _
    $region27: #{_forward.1} parent=1 // pred_check_branch
      %60 = sbr.rel (0) target = $region29
    $region28: #{_forward.1} parent=1 // pred_region
      _
    $region29: #{_forward.1} parent=1 // pred_fallthru
      _
    // Predicated region
    $region30: #{_forward.1} parent=1 // pred_check
      _
    $region31: #{_forward.1} parent=1 // pred_check_branch
      %62 = sbr.rel (0) target = $region33
    $region32: #{_forward.1} parent=1 // pred_region
      %64 = dma.done [#allocation3], 1024
    $region33: #{_forward.1} parent=1 // pred_fallthru
      _
    // Predicated region
    $region34: #{_forward.1} parent=1 // pred_check
      _
    $region35: #{_forward.1} parent=1 // pred_check_branch
      %66 = sbr.rel (0) target = $region37
    $region36: #{_forward.1} parent=1 // pred_region
      %68 = dma.done [#allocation5], 1024
    $region37: #{_forward.1} parent=1 // pred_fallthru
      _
    // Predicated region
    $region38: #{_forward.1} parent=1 // pred_check
      _
    $region39: #{_forward.1} parent=1 // pred_check_branch
      %70 = sbr.rel (0) target = $region41
    $region40: #{_forward.1} parent=1 // pred_region
      %72 = dma.done [#allocation5], 1024
    $region41: #{_forward.1} parent=1 // pred_fallthru
      _
    %v73 = vld [vmem:[%s0] sm:$0xf]
    %v74 = vld [vmem:[%s0 + $0x4] sm:$0xf]
    %v75 = vld [vmem:[#allocation2] sm:$0xf]
    %v76 = vld [vmem:[#allocation2 + $0x4] sm:$0xf]
    %v77 = vld [vmem:[#allocation2 + $0x8] sm:$0xf]
    %v78 = vld [vmem:[#allocation2 + $0xc] sm:$0xf]
    %v79 = vld [vmem:[#allocation2 + $0x10] sm:$0xf]
    %v80 = vld [vmem:[#allocation2 + $0x14] sm:$0xf]
    %v81 = vld [vmem:[#allocation2 + $0x18] sm:$0xf]
    %v82 = vld [vmem:[#allocation2 + $0x1c] sm:$0xf]
    %v83 = vld [vmem:[#allocation2 + $0x20] sm:$0xf]
    %v84 = vld [vmem:[#allocation2 + $0x24] sm:$0xf]
    %v85 = vld [vmem:[#allocation2 + $0x28] sm:$0xf]
    %v86 = vld [vmem:[#allocation2 + $0x2c] sm:$0xf]
    %v87 = vld [vmem:[#allocation2 + $0x30] sm:$0xf]
    %v88 = vld [vmem:[#allocation2 + $0x34] sm:$0xf]
    %v89 = vld [vmem:[#allocation2 + $0x38] sm:$0xf]
    %v90 = vld [vmem:[#allocation2 + $0x3c] sm:$0xf]
    %v91 = vld [vmem:[%s2] sm:$0x1]
    %v93 = vperm.slane %v91, 0
    %v97 = vunpack.c.l.b16 %v73
    %v98 = vunpack.c.l.b16 %v74
    %v99 = vpack.c.b16 %v98, %v97
    %v117 = vunpack.c.l.b16 %v75
    %v118 = vunpack.c.l.b16 %v76
    %v119 = vunpack.c.l.b16 %v77
    %v120 = vunpack.c.l.b16 %v78
    %v121 = vunpack.c.l.b16 %v79
    %v122 = vunpack.c.l.b16 %v80
    %v123 = vunpack.c.l.b16 %v81
    %v124 = vunpack.c.l.b16 %v82
    %v125 = vunpack.c.l.b16 %v83
    %v126 = vunpack.c.l.b16 %v84
    %v127 = vunpack.c.l.b16 %v85
    %v128 = vunpack.c.l.b16 %v86
    %v129 = vunpack.c.l.b16 %v87
    %v130 = vunpack.c.l.b16 %v88
    %v131 = vunpack.c.l.b16 %v89
    %v132 = vunpack.c.l.b16 %v90
    %v133 = vpack.c.b16 %v118, %v117
    %v134 = vpack.c.b16 %v120, %v119
    %v135 = vpack.c.b16 %v122, %v121
    %v136 = vpack.c.b16 %v124, %v123
    %v137 = vpack.c.b16 %v126, %v125
    %v138 = vpack.c.b16 %v128, %v127
    %v139 = vpack.c.b16 %v130, %v129
    %v140 = vpack.c.b16 %v132, %v131
    %149 = vmatpush.bf16.msra.mxu0 %v140
    %150 = vmatpush.bf16.msra.mxu0 %v139
    %151 = vmatpush.bf16.msra.mxu0 %v138
    %152 = vmatpush.bf16.msra.mxu0 %v137
    %153 = vmatpush.bf16.msra.mxu0 %v136
    %154 = vmatpush.bf16.msra.mxu0 %v135
    %155 = vmatpush.bf16.msra.mxu0 %v134
    %156 = vmatpush.bf16.msra.mxu0 %v133
    %157 = vmatmul.bf16.gmra.mxu0 %v99
    %v158 = vpop.f32.mrf.mxu0
    %v159 = vadd.f32 %v93, %v158
    %v160 = vpop.f32.mrf.mxu0
    %v161 = vadd.f32 %v93, %v160
    %162 = vdwg.mxu0
    %v163 = vmax.f32 %v159, 0.0
    %v164 = vmax.f32 %v161, 0.0
    %v165 = vpack.c.bf16 %v164, %v163
    %v166 = vld [vmem:[#allocation4] sm:$0xf]
    %v167 = vld [vmem:[#allocation4 + $0x4] sm:$0xf]
    %v168 = vld [vmem:[#allocation4 + $0x8] sm:$0xf]
    %v169 = vld [vmem:[#allocation4 + $0xc] sm:$0xf]
    %v170 = vld [vmem:[#allocation4 + $0x10] sm:$0xf]
    %v171 = vld [vmem:[#allocation4 + $0x14] sm:$0xf]
    %v172 = vld [vmem:[#allocation4 + $0x18] sm:$0xf]
    %v173 = vld [vmem:[#allocation4 + $0x1c] sm:$0xf]
    %v174 = vld [vmem:[#allocation4 + $0x20] sm:$0xf]
    %v175 = vld [vmem:[#allocation4 + $0x24] sm:$0xf]
    %v176 = vld [vmem:[#allocation4 + $0x28] sm:$0xf]
    %v177 = vld [vmem:[#allocation4 + $0x2c] sm:$0xf]
    %v178 = vld [vmem:[#allocation4 + $0x30] sm:$0xf]
    %v179 = vld [vmem:[#allocation4 + $0x34] sm:$0xf]
    %v180 = vld [vmem:[#allocation4 + $0x38] sm:$0xf]
    %v181 = vld [vmem:[#allocation4 + $0x3c] sm:$0xf]
    %v182 = vld [vmem:[%s4] sm:$0x1]
    %v184 = vperm.slane %v182, 0
    %v202 = vunpack.c.l.b16 %v166
    %v203 = vunpack.c.l.b16 %v167
    %v204 = vunpack.c.l.b16 %v168
    %v205 = vunpack.c.l.b16 %v169
    %v206 = vunpack.c.l.b16 %v170
    %v207 = vunpack.c.l.b16 %v171
    %v208 = vunpack.c.l.b16 %v172
    %v209 = vunpack.c.l.b16 %v173
    %v210 = vunpack.c.l.b16 %v174
    %v211 = vunpack.c.l.b16 %v175
    %v212 = vunpack.c.l.b16 %v176
    %v213 = vunpack.c.l.b16 %v177
    %v214 = vunpack.c.l.b16 %v178
    %v215 = vunpack.c.l.b16 %v179
    %v216 = vunpack.c.l.b16 %v180
    %v217 = vunpack.c.l.b16 %v181
    %v218 = vpack.c.b16 %v203, %v202
    %v219 = vpack.c.b16 %v205, %v204
    %v220 = vpack.c.b16 %v207, %v206
    %v221 = vpack.c.b16 %v209, %v208
    %v222 = vpack.c.b16 %v211, %v210
    %v223 = vpack.c.b16 %v213, %v212
    %v224 = vpack.c.b16 %v215, %v214
    %v225 = vpack.c.b16 %v217, %v216
    %234 = vmatpush.bf16.msra.mxu0 %v225
    %235 = vmatpush.bf16.msra.mxu0 %v224
    %236 = vmatpush.bf16.msra.mxu0 %v223
    %237 = vmatpush.bf16.msra.mxu0 %v222
    %238 = vmatpush.bf16.msra.mxu0 %v221
    %239 = vmatpush.bf16.msra.mxu0 %v220
    %240 = vmatpush.bf16.msra.mxu0 %v219
    %241 = vmatpush.bf16.msra.mxu0 %v218
    %242 = vmatmul.bf16.gmra.mxu0 %v165
    %v243 = vpop.f32.mrf.mxu0
    %v244 = vadd.f32 %v184, %v243
    %v245 = vpop.f32.mrf.mxu0
    %v246 = vadd.f32 %v184, %v245
    %247 = vdwg.mxu0
    %v248 = vmax.f32 %v244, 0.0
    %v249 = vmax.f32 %v246, 0.0
    %v250 = vpack.c.bf16 %v249, %v248
    %v251 = vld [vmem:[#allocation6] sm:$0xf]
    %v252 = vld [vmem:[#allocation6 + $0x4] sm:$0xf]
    %v253 = vld [vmem:[#allocation6 + $0x8] sm:$0xf]
    %v254 = vld [vmem:[#allocation6 + $0xc] sm:$0xf]
    %v255 = vld [vmem:[#allocation6 + $0x10] sm:$0xf]
    %v256 = vld [vmem:[#allocation6 + $0x14] sm:$0xf]
    %v257 = vld [vmem:[#allocation6 + $0x18] sm:$0xf]
    %v258 = vld [vmem:[#allocation6 + $0x1c] sm:$0xf]
    %v259 = vld [vmem:[#allocation6 + $0x20] sm:$0xf]
    %v260 = vld [vmem:[#allocation6 + $0x24] sm:$0xf]
    %v261 = vld [vmem:[#allocation6 + $0x28] sm:$0xf]
    %v262 = vld [vmem:[#allocation6 + $0x2c] sm:$0xf]
    %v263 = vld [vmem:[#allocation6 + $0x30] sm:$0xf]
    %v264 = vld [vmem:[#allocation6 + $0x34] sm:$0xf]
    %v265 = vld [vmem:[#allocation6 + $0x38] sm:$0xf]
    %v266 = vld [vmem:[#allocation6 + $0x3c] sm:$0xf]
    %v267 = vld [vmem:[%s6] sm:$0x1]
    %v269 = vperm.slane %v267, 0
    %v287 = vunpack.c.l.b16 %v251
    %v288 = vunpack.c.l.b16 %v252
    %v289 = vunpack.c.l.b16 %v253
    %v290 = vunpack.c.l.b16 %v254
    %v291 = vunpack.c.l.b16 %v255
    %v292 = vunpack.c.l.b16 %v256
    %v293 = vunpack.c.l.b16 %v257
    %v294 = vunpack.c.l.b16 %v258
    %v295 = vunpack.c.l.b16 %v259
    %v296 = vunpack.c.l.b16 %v260
    %v297 = vunpack.c.l.b16 %v261
    %v298 = vunpack.c.l.b16 %v262
    %v299 = vunpack.c.l.b16 %v263
    %v300 = vunpack.c.l.b16 %v264
    %v301 = vunpack.c.l.b16 %v265
    %v302 = vunpack.c.l.b16 %v266
    %v303 = vpack.c.b16 %v288, %v287
    %v304 = vpack.c.b16 %v290, %v289
    %v305 = vpack.c.b16 %v292, %v291
    %v306 = vpack.c.b16 %v294, %v293
    %v307 = vpack.c.b16 %v296, %v295
    %v308 = vpack.c.b16 %v298, %v297
    %v309 = vpack.c.b16 %v300, %v299
    %v310 = vpack.c.b16 %v302, %v301
    %319 = vmatpush.bf16.msra.mxu0 %v310
    %320 = vmatpush.bf16.msra.mxu0 %v309
    %321 = vmatpush.bf16.msra.mxu0 %v308
    %322 = vmatpush.bf16.msra.mxu0 %v307
    %323 = vmatpush.bf16.msra.mxu0 %v306
    %324 = vmatpush.bf16.msra.mxu0 %v305
    %325 = vmatpush.bf16.msra.mxu0 %v304
    %326 = vmatpush.bf16.msra.mxu0 %v303
    %327 = vmatmul.bf16.gmra.mxu0 %v250
    %v328 = vpop.f32.mrf.mxu0
    %v329 = vadd.f32 %v269, %v328
    %v330 = vpop.f32.mrf.mxu0
    %v331 = vadd.f32 %v269, %v330
    %332 = vdwg.mxu0
    %v333 = vpack.c.bf16 %v329, %v329
    %v334 = vpack.c.bf16 %v331, %v331
    %335 = vst [vmem:[%s7] sm:$0xf] %v333
    %336 = vst [vmem:[%s7 + $0x4] sm:$0xf] %v334
    // Predicated region
    $region42: #{_forward.1} parent=1 // pred_check
      _
    $region43: #{_forward.1} parent=1 // pred_check_branch
      %338 = sbr.rel (0) target = $region45
    $region44: #{_forward.1} parent=1 // pred_region
      _
    $region45: #{_forward.1} parent=1 // pred_fallthru
      _
    // Predicated region
    $region46: #{_forward.1} parent=1 // pred_check
      _
    $region47: #{_forward.1} parent=1 // pred_check_branch
      %340 = sbr.rel (0) target = $region49
    $region48: #{_forward.1} parent=1 // pred_region
      _
    $region49: #{_forward.1} parent=1 // pred_fallthru
      _
    %341 = vsyncpa [#allocation3], 1
    %342 = vsyncpa [#allocation5], 1

</llo_original>
